<compile_context>
chip_gen: v5e
topology: v5e:2x2
jax: 0.10.0
libtpu: 0.0.40
codegen_flags: <defaults>
</compile_context>

<pallas_src>
import functools
import math

import jax
import jax.numpy as jnp
from jax.experimental import pallas as pl
from jax.experimental.pallas import tpu as pltpu


def _fused_mha_ln_kernel(x_ref, wqkv_ref, bqkv_ref, wo_ref, bo_ref,
                         gamma_ref, beta_ref, o_ref,
                         *, num_heads, head_dim, eps, matmul_dtype):
    L, N, E = x_ref.shape
    H, D = num_heads, head_dim
    T = N * L                       # tokens
    B = N * H                       # attention batch (batch x heads)
    md = matmul_dtype

    # ---- (L, N, E) -> batch-major tokens; 2 KB in-kernel regroup (replaces 2 XLA transposes)
    x_nle = jnp.transpose(x_ref[...].astype(jnp.float32), (1, 0, 2))      # (N, L, E)
    x2d = x_nle.reshape(T, E)                                             # (T, E), n-major

    # ---- fused QKV projection: ONE 2-D MXU matmul; 1/sqrt(D) folded into q weights/bias ----
    qkv = jnp.dot(x2d.astype(md), wqkv_ref[...].astype(md),
                  preferred_element_type=jnp.float32) + bqkv_ref[...]     # (T, 3E)
    q, k, v = qkv[:, 0:E], qkv[:, E:2 * E], qkv[:, 2 * E:3 * E]

    # ---- split heads: lane slices + leading-dim stack only (no weight/activation bcast) ----
    def to_heads(t):                                                      # (T, E) -> (B, L, D)
        parts = [t[:, h * D:(h + 1) * D].reshape(N, L, D) for h in range(H)]
        return jnp.stack(parts, axis=1).reshape(B, L, D)

    qh, kh, vh = to_heads(q), to_heads(k), to_heads(v)

    # ---- scaled dot-product attention, batched over (batch x heads); softmax in f32 ----
    s = jnp.einsum('bld,bmd->blm', qh.astype(md), kh.astype(md),
                   preferred_element_type=jnp.float32)                    # (B, L, L)
    s = s - jnp.max(s, axis=-1, keepdims=True)
    p = jnp.exp(s)
    p = p * pl.reciprocal(jnp.sum(p, axis=-1, keepdims=True), approx=True)
    o = jnp.einsum('blm,bmd->bld', p.astype(md), vh.astype(md),
                   preferred_element_type=jnp.float32)                    # (B, L, D)

    # ---- merge heads with one lane-concat, then ONE 2-D output-projection matmul ----
    o4 = o.reshape(N, H, L, D)
    o_tok = jnp.concatenate([o4[:, h] for h in range(H)], axis=-1).reshape(T, E)
    proj = jnp.dot(o_tok.astype(md), wo_ref[...].astype(md),
                   preferred_element_type=jnp.float32) + bo_ref[...]      # (T, E)

    # ---- residual + LayerNorm over E (f32) ----
    y = proj + x2d
    mean = jnp.mean(y, axis=-1, keepdims=True)
    var = jnp.mean(jnp.square(y - mean), axis=-1, keepdims=True)
    out = (y - mean) * jax.lax.rsqrt(var + eps) * gamma_ref[...] + beta_ref[...]

    # ---- back to the module's (L, N, E) layout and store ----
    o_ref[...] = jnp.transpose(out.reshape(N, L, E), (1, 0, 2)).astype(o_ref.dtype)


def self_attention_block(x_lne, params, *, num_heads, eps=1e-5,
                         matmul_dtype=jnp.bfloat16):
    """x_lne: (L, N, E) — PyTorch nn.MultiheadAttention default (batch_first=False) layout."""
    L, N, E = x_lne.shape
    H = num_heads
    assert E % H == 0, "embed_size must be divisible by num_heads"
    D = E // H
    scale = 1.0 / math.sqrt(D)

    # ---- host-side one-time constant prep: fuse / transpose / scale-fold the weights ----
    w_qkv = jnp.concatenate([params["wq"] * scale, params["wk"], params["wv"]], axis=0).T  # (E, 3E)
    b_qkv = jnp.concatenate([params["bq"] * scale, params["bk"], params["bv"]], axis=1)    # (1, 3E)
    w_o = params["wo"].T                                                                   # (E, E)
    b_o = params["bo"].reshape(1, E)
    gamma = params["gamma"].reshape(1, E)
    beta = params["beta"].reshape(1, E)

    kernel = functools.partial(_fused_mha_ln_kernel, num_heads=H, head_dim=D,
                               eps=eps, matmul_dtype=matmul_dtype)

    def _full(shape):
        return pl.BlockSpec(shape, lambda i: (0,) * len(shape))

    # TODO(synk): for long sequences add a KV-tile grid axis with online softmax (flash
    # pattern); the single-block f32 (N*H, L, L) score tensor is only viable at small L.
    return pl.pallas_call(
        kernel,
        out_shape=jax.ShapeDtypeStruct((L, N, E), x_lne.dtype),
        grid_spec=pltpu.PrefetchScalarGridSpec(
            num_scalar_prefetch=0,
            grid=(1,),                       # whole (tiny, overhead-bound) problem in one step
            in_specs=[
                _full((L, N, E)),            # x in the module's native layout (no wrapper transpose)
                _full((E, 3 * E)),           # fused QKV weight (pre-transposed, q-scale folded)
                _full((1, 3 * E)),           # fused QKV bias
                _full((E, E)),               # output-proj weight (pre-transposed)
                _full((1, E)),               # output-proj bias
                _full((1, E)),               # LayerNorm gamma
                _full((1, E)),               # LayerNorm beta
            ],
            out_specs=_full((L, N, E)),
        ),
        compiler_params=pltpu.CompilerParams(
            dimension_semantics=("arbitrary",)),
    )(x_lne, w_qkv, b_qkv, w_o, b_o, gamma, beta)


def _reference(x_lne, params, *, num_heads, eps=1e-5):
    """Plain-JAX reference of the same forward pass (for the correctness check)."""
    L, N, E = x_lne.shape
    D = E // num_heads
    x = x_lne.astype(jnp.float32)
    q = jnp.einsum("lne,fe->lnf", x, params["wq"]) + params["bq"][0]
    k = jnp.einsum("lne,fe->lnf", x, params["wk"]) + params["bk"][0]
    v = jnp.einsum("lne,fe->lnf", x, params["wv"]) + params["bv"][0]

    def split(t):  # (L, N, E) -> (N, H, L, D)
        return jnp.transpose(t.reshape(L, N, num_heads, D), (1, 2, 0, 3))

    qh, kh, vh = split(q), split(k), split(v)
    s = jnp.einsum("nhld,nhmd->nhlm", qh, kh) / math.sqrt(D)
    p = jax.nn.softmax(s, axis=-1)
    o = jnp.einsum("nhlm,nhmd->nhld", p, vh)
    o = jnp.transpose(o, (2, 0, 1, 3)).reshape(L, N, E)
    proj = jnp.einsum("lne,fe->lnf", o, params["wo"]) + params["bo"][0]
    y = proj + x
    mean = jnp.mean(y, axis=-1, keepdims=True)
    var = jnp.mean(jnp.square(y - mean), axis=-1, keepdims=True)
    return (y - mean) * jax.lax.rsqrt(var + eps) * params["gamma"][0] + params["beta"][0]


if __name__ == "__main__":
    # Small shapes consistent with the module: seq=8, batch=2, embed=32, heads=4.
    L, N, E, H = 8, 2, 32, 4

    key = jax.random.PRNGKey(0)
    keys = jax.random.split(key, 9)
    w_scale = 1.0 / math.sqrt(E)

    params = {
        "wq": jax.random.normal(keys[0], (E, E), jnp.float32) * w_scale,
        "wk": jax.random.normal(keys[1], (E, E), jnp.float32) * w_scale,
        "wv": jax.random.normal(keys[2], (E, E), jnp.float32) * w_scale,
        "bq": jax.random.normal(keys[3], (1, E), jnp.float32) * 0.02,
        "bk": jax.random.normal(keys[4], (1, E), jnp.float32) * 0.02,
        "bv": jax.random.normal(keys[5], (1, E), jnp.float32) * 0.02,
        "wo": jax.random.normal(keys[6], (E, E), jnp.float32) * w_scale,
        "bo": jax.random.normal(keys[7], (1, E), jnp.float32) * 0.02,
        "gamma": jnp.ones((1, E), jnp.float32),
        "beta": jnp.zeros((1, E), jnp.float32),
    }

    x = jax.random.normal(keys[8], (L, N, E), jnp.float32)
    ref = _reference(x, params, num_heads=H)

    # f32 MXU operands: tight check (only the approx reciprocal deviates from exact softmax).
    out_f32 = jax.block_until_ready(
        self_attention_block(x, params, num_heads=H, matmul_dtype=jnp.float32))
    assert out_f32.shape == (L, N, E)
    assert jnp.allclose(out_f32, ref, atol=5e-3, rtol=5e-3), "f32 mismatch vs reference"

    # Default path: bf16 MXU operands, f32 accumulation + f32 softmax/LayerNorm (v6e/v7x perf).
    out = jax.block_until_ready(self_attention_block(x, params, num_heads=H))
    assert out.shape == (L, N, E)
    assert jnp.allclose(out, ref, atol=5e-2, rtol=5e-2), "bf16 mismatch vs reference"

    print("KERNEL_OK")
</pallas_src>

<mosaic_0001>
module attributes {stable_mosaic.version = 11 : i64} {
  func.func @_fused_mha_ln_kernel(%arg0: i32, %arg1: memref<8x2x32xf32, #tpu.memory_space<vmem>>, %arg2: memref<32x96xf32, #tpu.memory_space<vmem>>, %arg3: memref<1x96xf32, #tpu.memory_space<vmem>>, %arg4: memref<32x32xf32, #tpu.memory_space<vmem>>, %arg5: memref<1x32xf32, #tpu.memory_space<vmem>>, %arg6: memref<1x32xf32, #tpu.memory_space<vmem>>, %arg7: memref<1x32xf32, #tpu.memory_space<vmem>>, %arg8: memref<8x2x32xf32, #tpu.memory_space<vmem>>) attributes {dimension_semantics = [#tpu.dimension_semantics<arbitrary>], iteration_bounds = array<i64: 1>, scalar_prefetch = 0 : i64, scratch_operands = 0 : i64, tpu.core_type = #tpu.core_type<tc>, window_params = [{pipeline_mode = #tpu.pipeline_mode<synchronous>, transform_indices = @transform_0, window_bounds = array<i64: 8, 2, 32>}, {pipeline_mode = #tpu.pipeline_mode<synchronous>, transform_indices = @transform_1, window_bounds = array<i64: 32, 96>}, {pipeline_mode = #tpu.pipeline_mode<synchronous>, transform_indices = @transform_2, window_bounds = array<i64: 1, 96>}, {pipeline_mode = #tpu.pipeline_mode<synchronous>, transform_indices = @transform_3, window_bounds = array<i64: 32, 32>}, {pipeline_mode = #tpu.pipeline_mode<synchronous>, transform_indices = @transform_4, window_bounds = array<i64: 1, 32>}, {pipeline_mode = #tpu.pipeline_mode<synchronous>, transform_indices = @transform_5, window_bounds = array<i64: 1, 32>}, {pipeline_mode = #tpu.pipeline_mode<synchronous>, transform_indices = @transform_6, window_bounds = array<i64: 1, 32>}, {pipeline_mode = #tpu.pipeline_mode<synchronous>, transform_indices = @transform_7, window_bounds = array<i64: 8, 2, 32>}]} {
    %c0 = arith.constant 0 : index
    %c0_0 = arith.constant 0 : index
    %c0_1 = arith.constant 0 : index
    %0 = vector.load %arg1[%c0, %c0_0, %c0_1] : memref<8x2x32xf32, #tpu.memory_space<vmem>>, vector<8x2x32xf32>
    %1 = tpu.transpose %0, [1, 0, 2] : vector<8x2x32xf32> -> vector<2x8x32xf32>
    %2 = vector.shape_cast %1 : vector<2x8x32xf32> to vector<16x32xf32>
    %c0_2 = arith.constant 0 : index
    %c0_3 = arith.constant 0 : index
    %3 = vector.load %arg2[%c0_2, %c0_3] : memref<32x96xf32, #tpu.memory_space<vmem>>, vector<32x96xf32>
    %cst = arith.constant dense<0.000000e+00> : vector<16x96xf32>
    %4 = tpu.matmul %2, %3, %cst {dimension_numbers = #tpu.dot_dimension_numbers<[1], [0], [0], [1], [0, 0, 1, 1], [], []>} : vector<16x32xf32>, vector<32x96xf32>, vector<16x96xf32> -> vector<16x96xf32>
    %c0_4 = arith.constant 0 : index
    %c0_5 = arith.constant 0 : index
    %5 = vector.load %arg3[%c0_4, %c0_5] : memref<1x96xf32, #tpu.memory_space<vmem>>, vector<1x96xf32>
    %6 = vector.broadcast %5 : vector<1x96xf32> to vector<16x96xf32>
    %7 = arith.addf %4, %6 : vector<16x96xf32>
    %8 = vector.extract_strided_slice %7 {offsets = [0, 0], sizes = [16, 32], strides = [1, 1]} : vector<16x96xf32> to vector<16x32xf32>
    %9 = vector.extract_strided_slice %7 {offsets = [0, 32], sizes = [16, 32], strides = [1, 1]} : vector<16x96xf32> to vector<16x32xf32>
    %10 = vector.extract_strided_slice %7 {offsets = [0, 64], sizes = [16, 32], strides = [1, 1]} : vector<16x96xf32> to vector<16x32xf32>
    %11 = vector.extract_strided_slice %8 {offsets = [0, 0], sizes = [16, 8], strides = [1, 1]} : vector<16x32xf32> to vector<16x8xf32>
    %12 = vector.shape_cast %11 : vector<16x8xf32> to vector<2x8x8xf32>
    %13 = vector.extract_strided_slice %8 {offsets = [0, 8], sizes = [16, 8], strides = [1, 1]} : vector<16x32xf32> to vector<16x8xf32>
    %14 = vector.shape_cast %13 : vector<16x8xf32> to vector<2x8x8xf32>
    %15 = vector.extract_strided_slice %8 {offsets = [0, 16], sizes = [16, 8], strides = [1, 1]} : vector<16x32xf32> to vector<16x8xf32>
    %16 = vector.shape_cast %15 : vector<16x8xf32> to vector<2x8x8xf32>
    %17 = vector.extract_strided_slice %8 {offsets = [0, 24], sizes = [16, 8], strides = [1, 1]} : vector<16x32xf32> to vector<16x8xf32>
    %18 = vector.shape_cast %17 : vector<16x8xf32> to vector<2x8x8xf32>
    %19 = vector.shape_cast %12 : vector<2x8x8xf32> to vector<2x1x8x8xf32>
    %20 = vector.shape_cast %14 : vector<2x8x8xf32> to vector<2x1x8x8xf32>
    %21 = vector.shape_cast %16 : vector<2x8x8xf32> to vector<2x1x8x8xf32>
    %22 = vector.shape_cast %18 : vector<2x8x8xf32> to vector<2x1x8x8xf32>
    %23 = tpu.concatenate %19, %20, %21, %22 in 1 : vector<2x1x8x8xf32>, vector<2x1x8x8xf32>, vector<2x1x8x8xf32>, vector<2x1x8x8xf32> -> vector<2x4x8x8xf32>
    %24 = vector.shape_cast %23 : vector<2x4x8x8xf32> to vector<8x8x8xf32>
    %25 = vector.extract_strided_slice %9 {offsets = [0, 0], sizes = [16, 8], strides = [1, 1]} : vector<16x32xf32> to vector<16x8xf32>
    %26 = vector.shape_cast %25 : vector<16x8xf32> to vector<2x8x8xf32>
    %27 = vector.extract_strided_slice %9 {offsets = [0, 8], sizes = [16, 8], strides = [1, 1]} : vector<16x32xf32> to vector<16x8xf32>
    %28 = vector.shape_cast %27 : vector<16x8xf32> to vector<2x8x8xf32>
    %29 = vector.extract_strided_slice %9 {offsets = [0, 16], sizes = [16, 8], strides = [1, 1]} : vector<16x32xf32> to vector<16x8xf32>
    %30 = vector.shape_cast %29 : vector<16x8xf32> to vector<2x8x8xf32>
    %31 = vector.extract_strided_slice %9 {offsets = [0, 24], sizes = [16, 8], strides = [1, 1]} : vector<16x32xf32> to vector<16x8xf32>
    %32 = vector.shape_cast %31 : vector<16x8xf32> to vector<2x8x8xf32>
    %33 = vector.shape_cast %26 : vector<2x8x8xf32> to vector<2x1x8x8xf32>
    %34 = vector.shape_cast %28 : vector<2x8x8xf32> to vector<2x1x8x8xf32>
    %35 = vector.shape_cast %30 : vector<2x8x8xf32> to vector<2x1x8x8xf32>
    %36 = vector.shape_cast %32 : vector<2x8x8xf32> to vector<2x1x8x8xf32>
    %37 = tpu.concatenate %33, %34, %35, %36 in 1 : vector<2x1x8x8xf32>, vector<2x1x8x8xf32>, vector<2x1x8x8xf32>, vector<2x1x8x8xf32> -> vector<2x4x8x8xf32>
    %38 = vector.shape_cast %37 : vector<2x4x8x8xf32> to vector<8x8x8xf32>
    %39 = vector.extract_strided_slice %10 {offsets = [0, 0], sizes = [16, 8], strides = [1, 1]} : vector<16x32xf32> to vector<16x8xf32>
    %40 = vector.shape_cast %39 : vector<16x8xf32> to vector<2x8x8xf32>
    %41 = vector.extract_strided_slice %10 {offsets = [0, 8], sizes = [16, 8], strides = [1, 1]} : vector<16x32xf32> to vector<16x8xf32>
    %42 = vector.shape_cast %41 : vector<16x8xf32> to vector<2x8x8xf32>
    %43 = vector.extract_strided_slice %10 {offsets = [0, 16], sizes = [16, 8], strides = [1, 1]} : vector<16x32xf32> to vector<16x8xf32>
    %44 = vector.shape_cast %43 : vector<16x8xf32> to vector<2x8x8xf32>
    %45 = vector.extract_strided_slice %10 {offsets = [0, 24], sizes = [16, 8], strides = [1, 1]} : vector<16x32xf32> to vector<16x8xf32>
    %46 = vector.shape_cast %45 : vector<16x8xf32> to vector<2x8x8xf32>
    %47 = vector.shape_cast %40 : vector<2x8x8xf32> to vector<2x1x8x8xf32>
    %48 = vector.shape_cast %42 : vector<2x8x8xf32> to vector<2x1x8x8xf32>
    %49 = vector.shape_cast %44 : vector<2x8x8xf32> to vector<2x1x8x8xf32>
    %50 = vector.shape_cast %46 : vector<2x8x8xf32> to vector<2x1x8x8xf32>
    %51 = tpu.concatenate %47, %48, %49, %50 in 1 : vector<2x1x8x8xf32>, vector<2x1x8x8xf32>, vector<2x1x8x8xf32>, vector<2x1x8x8xf32> -> vector<2x4x8x8xf32>
    %52 = vector.shape_cast %51 : vector<2x4x8x8xf32> to vector<8x8x8xf32>
    "tpu.trace_start"() <{level = 10 : i32, message = "bld,bmd->blm"}> : () -> ()
    %cst_6 = arith.constant dense<0.000000e+00> : vector<8x8x8xf32>
    %53 = tpu.matmul %24, %38, %cst_6 {dimension_numbers = #tpu.dot_dimension_numbers<[2], [2], [1], [1], [0, 0, 0, 1, 1, 1], [0], [0]>} : vector<8x8x8xf32>, vector<8x8x8xf32>, vector<8x8x8xf32> -> vector<8x8x8xf32>
    "tpu.trace_stop"() : () -> ()
    %cst_7 = arith.constant dense<0xFF800000> : vector<8x8xf32>
    %54 = vector.multi_reduction <maximumf>, %53, %cst_7 [2] : vector<8x8x8xf32> to vector<8x8xf32>
    %55 = vector.shape_cast %54 : vector<8x8xf32> to vector<8x8x1xf32>
    %56 = vector.broadcast %55 : vector<8x8x1xf32> to vector<8x8x8xf32>
    %57 = arith.subf %53, %56 : vector<8x8x8xf32>
    %58 = math.exp %57 : vector<8x8x8xf32>
    %cst_8 = arith.constant dense<0.000000e+00> : vector<8x8xf32>
    %59 = vector.multi_reduction <add>, %58, %cst_8 [2] : vector<8x8x8xf32> to vector<8x8xf32>
    %60 = vector.shape_cast %59 : vector<8x8xf32> to vector<8x8x1xf32>
    %61 = tpu.reciprocal %60 {approx = true} : vector<8x8x1xf32> -> vector<8x8x1xf32>
    %62 = vector.broadcast %61 : vector<8x8x1xf32> to vector<8x8x8xf32>
    %63 = arith.mulf %58, %62 : vector<8x8x8xf32>
    "tpu.trace_start"() <{level = 10 : i32, message = "blm,bmd->bld"}> : () -> ()
    %cst_9 = arith.constant dense<0.000000e+00> : vector<8x8x8xf32>
    %64 = tpu.matmul %63, %52, %cst_9 {dimension_numbers = #tpu.dot_dimension_numbers<[2], [1], [1], [2], [0, 0, 0, 1, 1, 2], [0], [0]>} : vector<8x8x8xf32>, vector<8x8x8xf32>, vector<8x8x8xf32> -> vector<8x8x8xf32>
    "tpu.trace_stop"() : () -> ()
    %65 = vector.shape_cast %64 : vector<8x8x8xf32> to vector<2x4x8x8xf32>
    %66 = vector.extract_strided_slice %65 {offsets = [0, 0, 0, 0], sizes = [2, 1, 8, 8], strides = [1, 1, 1, 1]} : vector<2x4x8x8xf32> to vector<2x1x8x8xf32>
    %67 = vector.shape_cast %66 : vector<2x1x8x8xf32> to vector<2x8x8xf32>
    %68 = vector.extract_strided_slice %65 {offsets = [0, 1, 0, 0], sizes = [2, 1, 8, 8], strides = [1, 1, 1, 1]} : vector<2x4x8x8xf32> to vector<2x1x8x8xf32>
    %69 = vector.shape_cast %68 : vector<2x1x8x8xf32> to vector<2x8x8xf32>
    %70 = vector.extract_strided_slice %65 {offsets = [0, 2, 0, 0], sizes = [2, 1, 8, 8], strides = [1, 1, 1, 1]} : vector<2x4x8x8xf32> to vector<2x1x8x8xf32>
    %71 = vector.shape_cast %70 : vector<2x1x8x8xf32> to vector<2x8x8xf32>
    %72 = vector.extract_strided_slice %65 {offsets = [0, 3, 0, 0], sizes = [2, 1, 8, 8], strides = [1, 1, 1, 1]} : vector<2x4x8x8xf32> to vector<2x1x8x8xf32>
    %73 = vector.shape_cast %72 : vector<2x1x8x8xf32> to vector<2x8x8xf32>
    %74 = tpu.concatenate %67, %69, %71, %73 in 2 : vector<2x8x8xf32>, vector<2x8x8xf32>, vector<2x8x8xf32>, vector<2x8x8xf32> -> vector<2x8x32xf32>
    %75 = vector.shape_cast %74 : vector<2x8x32xf32> to vector<16x32xf32>
    %c0_10 = arith.constant 0 : index
    %c0_11 = arith.constant 0 : index
    %76 = vector.load %arg4[%c0_10, %c0_11] : memref<32x32xf32, #tpu.memory_space<vmem>>, vector<32x32xf32>
    %cst_12 = arith.constant dense<0.000000e+00> : vector<16x32xf32>
    %77 = tpu.matmul %75, %76, %cst_12 {dimension_numbers = #tpu.dot_dimension_numbers<[1], [0], [0], [1], [0, 0, 1, 1], [], []>} : vector<16x32xf32>, vector<32x32xf32>, vector<16x32xf32> -> vector<16x32xf32>
    %c0_13 = arith.constant 0 : index
    %c0_14 = arith.constant 0 : index
    %78 = vector.load %arg5[%c0_13, %c0_14] : memref<1x32xf32, #tpu.memory_space<vmem>>, vector<1x32xf32>
    %79 = vector.broadcast %78 : vector<1x32xf32> to vector<16x32xf32>
    %80 = arith.addf %77, %79 : vector<16x32xf32>
    %81 = arith.addf %80, %2 : vector<16x32xf32>
    %cst_15 = arith.constant dense<0.000000e+00> : vector<16xf32>
    %82 = vector.multi_reduction <add>, %81, %cst_15 [1] : vector<16x32xf32> to vector<16xf32>
    %83 = vector.shape_cast %82 : vector<16xf32> to vector<16x1xf32>
    %cst_16 = arith.constant 3.200000e+01 : f32
    %84 = vector.broadcast %cst_16 : f32 to vector<16x1xf32>
    %85 = arith.divf %83, %84 : vector<16x1xf32>
    %86 = vector.broadcast %85 : vector<16x1xf32> to vector<16x32xf32>
    %87 = arith.subf %81, %86 : vector<16x32xf32>
    %88 = arith.mulf %87, %87 : vector<16x32xf32>
    %cst_17 = arith.constant dense<0.000000e+00> : vector<16xf32>
    %89 = vector.multi_reduction <add>, %88, %cst_17 [1] : vector<16x32xf32> to vector<16xf32>
    %90 = vector.shape_cast %89 : vector<16xf32> to vector<16x1xf32>
    %cst_18 = arith.constant 3.200000e+01 : f32
    %91 = vector.broadcast %cst_18 : f32 to vector<16x1xf32>
    %92 = arith.divf %90, %91 : vector<16x1xf32>
    %93 = vector.broadcast %85 : vector<16x1xf32> to vector<16x32xf32>
    %94 = arith.subf %81, %93 : vector<16x32xf32>
    %cst_19 = arith.constant 9.99999974E-6 : f32
    %95 = vector.broadcast %cst_19 : f32 to vector<16x1xf32>
    %96 = arith.addf %92, %95 : vector<16x1xf32>
    %97 = math.rsqrt %96 : vector<16x1xf32>
    %98 = vector.broadcast %97 : vector<16x1xf32> to vector<16x32xf32>
    %99 = arith.mulf %94, %98 : vector<16x32xf32>
    %c0_20 = arith.constant 0 : index
    %c0_21 = arith.constant 0 : index
    %100 = vector.load %arg6[%c0_20, %c0_21] : memref<1x32xf32, #tpu.memory_space<vmem>>, vector<1x32xf32>
    %101 = vector.broadcast %100 : vector<1x32xf32> to vector<16x32xf32>
    %102 = arith.mulf %99, %101 : vector<16x32xf32>
    %c0_22 = arith.constant 0 : index
    %c0_23 = arith.constant 0 : index
    %103 = vector.load %arg7[%c0_22, %c0_23] : memref<1x32xf32, #tpu.memory_space<vmem>>, vector<1x32xf32>
    %104 = vector.broadcast %103 : vector<1x32xf32> to vector<16x32xf32>
    %105 = arith.addf %102, %104 : vector<16x32xf32>
    %106 = vector.shape_cast %105 : vector<16x32xf32> to vector<2x8x32xf32>
    %107 = tpu.transpose %106, [1, 0, 2] : vector<2x8x32xf32> -> vector<8x2x32xf32>
    %c0_24 = arith.constant 0 : index
    %c0_25 = arith.constant 0 : index
    %c0_26 = arith.constant 0 : index
    %108 = vector.load %arg8[%c0_24, %c0_25, %c0_26] : memref<8x2x32xf32, #tpu.memory_space<vmem>>, vector<8x2x32xf32>
    tpu.vector_store %arg8[%c0_24, %c0_25, %c0_26], %107 {strides = array<i32>} : memref<8x2x32xf32, #tpu.memory_space<vmem>>, vector<8x2x32xf32>,
    return
  }
  func.func @transform_0(%arg0: i32) -> (i32, i32, i32) {
    %c0_i32 = arith.constant 0 : i32
    %c0_i32_0 = arith.constant 0 : i32
    %c0_i32_1 = arith.constant 0 : i32
    %c0_i32_2 = arith.constant 0 : i32
    return %c0_i32, %c0_i32_0, %c0_i32_1 : i32, i32, i32
  }
  func.func @transform_1(%arg0: i32) -> (i32, i32) {
    %c0_i32 = arith.constant 0 : i32
    %c0_i32_0 = arith.constant 0 : i32
    %c0_i32_1 = arith.constant 0 : i32
    return %c0_i32, %c0_i32_0 : i32, i32
  }
  func.func @transform_2(%arg0: i32) -> (i32, i32) {
    %c0_i32 = arith.constant 0 : i32
    %c0_i32_0 = arith.constant 0 : i32
    %c0_i32_1 = arith.constant 0 : i32
    return %c0_i32, %c0_i32_0 : i32, i32
  }
  func.func @transform_3(%arg0: i32) -> (i32, i32) {
    %c0_i32 = arith.constant 0 : i32
    %c0_i32_0 = arith.constant 0 : i32
    %c0_i32_1 = arith.constant 0 : i32
    return %c0_i32, %c0_i32_0 : i32, i32
  }
  func.func @transform_4(%arg0: i32) -> (i32, i32) {
    %c0_i32 = arith.constant 0 : i32
    %c0_i32_0 = arith.constant 0 : i32
    %c0_i32_1 = arith.constant 0 : i32
    return %c0_i32, %c0_i32_0 : i32, i32
  }
  func.func @transform_5(%arg0: i32) -> (i32, i32) {
    %c0_i32 = arith.constant 0 : i32
    %c0_i32_0 = arith.constant 0 : i32
    %c0_i32_1 = arith.constant 0 : i32
    return %c0_i32, %c0_i32_0 : i32, i32
  }
  func.func @transform_6(%arg0: i32) -> (i32, i32) {
    %c0_i32 = arith.constant 0 : i32
    %c0_i32_0 = arith.constant 0 : i32
    %c0_i32_1 = arith.constant 0 : i32
    return %c0_i32, %c0_i32_0 : i32, i32
  }
  func.func @transform_7(%arg0: i32) -> (i32, i32, i32) {
    %c0_i32 = arith.constant 0 : i32
    %c0_i32_0 = arith.constant 0 : i32
    %c0_i32_1 = arith.constant 0 : i32
    %c0_i32_2 = arith.constant 0 : i32
    return %c0_i32, %c0_i32_0, %c0_i32_1 : i32, i32, i32
  }
}

</mosaic_0001>

<llo_original>
// kernel: tpu_custom_call.1
$region0: #{tpu_custom_call.1}
  #allocation0 [shape = 'u32[]', space=smem, size = 0x4, offset = 0x4, fixed_abs, tag = 'smem constant byte address 0x4 - core index']
  #allocation1 [shape = 'u32[72,128]{1,0:T(1,128)}', space=vmem, size = 0x9000, scoped, tag = 'internal scratch']
  %s0 = inlined_call_operand.hbm [shape: f32[8,2,32], index: 0, kind: input, shape index: {}]
  %s1 = inlined_call_operand.hbm [shape: f32[32,96], index: 1, kind: input, shape index: {}]
  %s2 = inlined_call_operand.vmem [shape: f32[1,96], index: 2, kind: input, shape index: {}]
  %s3 = inlined_call_operand.hbm [shape: f32[32,32], index: 3, kind: input, shape index: {}]
  %s4 = inlined_call_operand.vmem [shape: f32[1,32], index: 4, kind: input, shape index: {}]
  %s5 = inlined_call_operand.vmem [shape: f32[1,32], index: 5, kind: input, shape index: {}]
  %s6 = inlined_call_operand.vmem [shape: f32[1,32], index: 6, kind: input, shape index: {}]
  %s7 = inlined_call_operand.hbm [shape: f32[8,2,32], index: 7, kind: output, shape index: {}]
  %s8 = sld [smem:[#allocation0]]
  $region50: #{tpu_custom_call.1} parent=0
    _
  %s10 = ssub.s32 1, %s8
  %s11 = scalar_select 0, %s10, %s8
  $region1: #{tpu_custom_call.1} parent=0
    #allocation2 [shape = 'u8[8192]{0}', space=vmem, size = 0x2000, scoped, tag = 'input window, operand 0, single buffered']
    #allocation3 [shape = 's32[1]{0}', space=sflag, size = 0x4, scoped, tag = 'scoped memory for tpu_custom_call.1']
    #allocation4 [shape = 's32[1]{0}', space=sflag, size = 0x4, scoped, tag = 'scoped memory for tpu_custom_call.1']
    #allocation5 [shape = 'u8[16384]{0}', space=vmem, size = 0x4000, scoped, tag = 'input window, operand 1, single buffered']
    #allocation6 [shape = 's32[1]{0}', space=sflag, size = 0x4, scoped, tag = 'scoped memory for tpu_custom_call.1']
    #allocation7 [shape = 'u8[16384]{0}', space=vmem, size = 0x4000, scoped, tag = 'input window, operand 3, single buffered']
    #allocation8 [shape = 'u8[8192]{0}', space=vmem, size = 0x2000, scoped, tag = 'output window, operand 0, single buffered']
    %12 = vsyncpa [#allocation3], 0
    %13 = vsyncpa [#allocation6], 0
    %14 = vsyncpa [#allocation4], 0
    // Predicated region
    $region2: #{tpu_custom_call.1} parent=1 // pred_check
      _
    $region3: #{tpu_custom_call.1} parent=1 // pred_check_branch
      %16 = sbr.rel (0) target = $region5
    $region4: #{tpu_custom_call.1} parent=1 // pred_region
      %18 = vsyncadd [#allocation3], 0
      %s19 = sshll.u32 %s0, 4
      %s20 = int_to_ptr.hbm [resolvable:$true] %s19
      %s21 = sshll.u32 [#allocation2], 4
      %s22 = int_to_ptr.vmem [resolvable:$true] %s21
      %27 = dma.hbm_to_vmem [thread:$0]  %s20, 256, %s22, [#allocation3], 32, 32, 2
    $region5: #{tpu_custom_call.1} parent=1 // pred_fallthru
      _
    // Predicated region
    $region6: #{tpu_custom_call.1} parent=1 // pred_check
      _
    $region7: #{tpu_custom_call.1} parent=1 // pred_check_branch
      %29 = sbr.rel (0) target = $region9
    $region8: #{tpu_custom_call.1} parent=1 // pred_region
      %31 = vsyncadd [#allocation6], 0
      %s32 = sshll.u32 %s1, 4
      %s33 = int_to_ptr.hbm [resolvable:$true] %s32
      %s34 = sshll.u32 [#allocation5], 4
      %s35 = int_to_ptr.vmem [resolvable:$true] %s34
      %40 = dma.hbm_to_vmem [thread:$0]  %s33, 512, %s35, [#allocation6], 128, 128, 8
    $region9: #{tpu_custom_call.1} parent=1 // pred_fallthru
      _
    // Predicated region
    $region10: #{tpu_custom_call.1} parent=1 // pred_check
      _
    $region11: #{tpu_custom_call.1} parent=1 // pred_check_branch
      %42 = sbr.rel (0) target = $region13
    $region12: #{tpu_custom_call.1} parent=1 // pred_region
      _
    $region13: #{tpu_custom_call.1} parent=1 // pred_fallthru
      _
    // Predicated region
    $region14: #{tpu_custom_call.1} parent=1 // pred_check
      _
    $region15: #{tpu_custom_call.1} parent=1 // pred_check_branch
      %44 = sbr.rel (0) target = $region17
    $region16: #{tpu_custom_call.1} parent=1 // pred_region
      %46 = vsyncadd [#allocation6], 0
      %s47 = sshll.u32 %s3, 4
      %s48 = int_to_ptr.hbm [resolvable:$true] %s47
      %s49 = sshll.u32 [#allocation7], 4
      %s50 = int_to_ptr.vmem [resolvable:$true] %s49
      %55 = dma.hbm_to_vmem [thread:$0]  %s48, 512, %s50, [#allocation6], 128, 128, 8
    $region17: #{tpu_custom_call.1} parent=1 // pred_fallthru
      _
    // Predicated region
    $region18: #{tpu_custom_call.1} parent=1 // pred_check
      _
    $region19: #{tpu_custom_call.1} parent=1 // pred_check_branch
      %57 = sbr.rel (0) target = $region21
    $region20: #{tpu_custom_call.1} parent=1 // pred_region
      _
    $region21: #{tpu_custom_call.1} parent=1 // pred_fallthru
      _
    // Predicated region
    $region22: #{tpu_custom_call.1} parent=1 // pred_check
      _
    $region23: #{tpu_custom_call.1} parent=1 // pred_check_branch
      %59 = sbr.rel (0) target = $region25
    $region24: #{tpu_custom_call.1} parent=1 // pred_region
      _
    $region25: #{tpu_custom_call.1} parent=1 // pred_fallthru
      _
    // Predicated region
    $region26: #{tpu_custom_call.1} parent=1 // pred_check
      _
    $region27: #{tpu_custom_call.1} parent=1 // pred_check_branch
      %61 = sbr.rel (0) target = $region29
    $region28: #{tpu_custom_call.1} parent=1 // pred_region
      _
    $region29: #{tpu_custom_call.1} parent=1 // pred_fallthru
      _
    // Predicated region
    $region30: #{tpu_custom_call.1} parent=1 // pred_check
      _
    $region31: #{tpu_custom_call.1} parent=1 // pred_check_branch
      %63 = sbr.rel (0) target = $region33
    $region32: #{tpu_custom_call.1} parent=1 // pred_region
      %65 = dma.done [#allocation3], 256
    $region33: #{tpu_custom_call.1} parent=1 // pred_fallthru
      _
    // Predicated region
    $region34: #{tpu_custom_call.1} parent=1 // pred_check
      _
    $region35: #{tpu_custom_call.1} parent=1 // pred_check_branch
      %67 = sbr.rel (0) target = $region37
    $region36: #{tpu_custom_call.1} parent=1 // pred_region
      %69 = dma.done [#allocation6], 512
    $region37: #{tpu_custom_call.1} parent=1 // pred_fallthru
      _
    // Predicated region
    $region38: #{tpu_custom_call.1} parent=1 // pred_check
      _
    $region39: #{tpu_custom_call.1} parent=1 // pred_check_branch
      %71 = sbr.rel (0) target = $region41
    $region40: #{tpu_custom_call.1} parent=1 // pred_region
      %73 = dma.done [#allocation6], 512
    $region41: #{tpu_custom_call.1} parent=1 // pred_fallthru
      _
    %v74 = vld [vmem:[#allocation2] sm:$0x3]
    %v75 = vld [vmem:[#allocation2 + $0x2] sm:$0x3]
    %v76 = vld [vmem:[#allocation2 + $0x4] sm:$0x3]
    %v77 = vld [vmem:[#allocation2 + $0x6] sm:$0x3]
    %v78 = vld [vmem:[#allocation2 + $0x8] sm:$0x3]
    %v79 = vld [vmem:[#allocation2 + $0xa] sm:$0x3]
    %v80 = vld [vmem:[#allocation2 + $0xc] sm:$0x3]
    %v81 = vld [vmem:[#allocation2 + $0xe] sm:$0x3]
    %v82 = vrot.slane %v76, 4
    %vm83 = vcmask 1047556
    %v84 = vsel %vm83, %v82, %v74
    %v86 = vunpack.c.l.s4 1983009808
    %v87 = vunpack.c.0.s8 %v86
    %v88 = vperm.slane %v84, %v87
    %v89 = vrot.slane %v77, 4
    %v90 = vsel %vm83, %v89, %v75
    %v92 = vunpack.c.l.s4 1983009808
    %v93 = vunpack.c.0.s8 %v92
    %v94 = vperm.slane %v90, %v93
    %v95 = vrot.slane %v80, 4
    %v96 = vsel %vm83, %v95, %v78
    %v98 = vunpack.c.l.s4 1983009808
    %v99 = vunpack.c.0.s8 %v98
    %v100 = vperm.slane %v96, %v99
    %v101 = vrot.slane %v81, 4
    %v102 = vsel %vm83, %v101, %v79
    %v104 = vunpack.c.l.s4 1983009808
    %v105 = vunpack.c.0.s8 %v104
    %v106 = vperm.slane %v102, %v105
    %v107 = vrot.slane %v94, 4
    %v108 = vsel %vm83, %v107, %v88
    %v110 = vunpack.c.l.s4 1934713408
    %v111 = vunpack.c.0.s8 %v110
    %v112 = vperm.slane %v108, %v111
    %v113 = vrot.slane %v106, 4
    %v114 = vsel %vm83, %v113, %v100
    %v116 = vunpack.c.l.s4 1934713408
    %v117 = vunpack.c.0.s8 %v116
    %v118 = vperm.slane %v114, %v117
    %v119 = vrot.slane %v118, 4
    %v120 = vsel %vm83, %v119, %v112
    %v121 = vrot.slane %v112, 4
    %v122 = vsel %vm83, %v118, %v121
    %v123 = vld [vmem:[#allocation5] sm:$0xff]
    %v124 = vld [vmem:[#allocation5 + $0x8] sm:$0xff]
    %v125 = vld [vmem:[#allocation5 + $0x10] sm:$0xff]
    %v126 = vld [vmem:[#allocation5 + $0x18] sm:$0xff]
    %v127 = vld [vmem:[%s2] sm:$0x1]
    %v129 = vperm.slane %v127, 0
    %vm131 = vcmask 261120
    %v133 = vsel %vm131, %v120, 0
    %v136 = vsel %vm131, %v122, 0
    %138 = vmatpush.msra.mxu0 0.0
    %139 = vmatpush.msra.mxu0 0.0
    %140 = vmatpush.msra.mxu0 0.0
    %141 = vmatpush.msra.mxu0 0.0
    %142 = vmatpush.msra.mxu0 0.0
    %143 = vmatpush.msra.mxu0 0.0
    %144 = vmatpush.msra.mxu0 0.0
    %145 = vmatpush.msra.mxu0 0.0
    %146 = vmatpush.msra.mxu0 0.0
    %147 = vmatpush.msra.mxu0 0.0
    %148 = vmatpush.msra.mxu0 0.0
    %149 = vmatpush.msra.mxu0 0.0
    %150 = vmatpush.msra.mxu0 %v126
    %151 = vmatpush.msra.mxu0 %v125
    %152 = vmatpush.msra.mxu0 %v124
    %153 = vmatpush.msra.mxu0 %v123
    %154 = vmatmul.f32.gmra.mxu0 %v133
    %v155 = vpop.f32.mrf.mxu0
    %v156 = vadd.f32 %v129, %v155
    %157 = vmatmul.f32.gmra.mxu0 %v136
    %v158 = vpop.f32.mrf.mxu0
    %v159 = vadd.f32 %v129, %v158
    %160 = vdwg.mxu0
    %163 = vrot.lane.b32.xlu0 %v156, 120
    %v164 = vpop.permute.xlu0 %163
    %165 = vrot.lane.b32.xlu0 %v159, 120
    %v166 = vpop.permute.xlu0 %165
    %167 = vrot.lane.b32.xlu0 %v156, 112
    %v168 = vpop.permute.xlu0 %167
    %169 = vrot.lane.b32.xlu0 %v159, 112
    %v170 = vpop.permute.xlu0 %169
    %171 = vrot.lane.b32.xlu0 %v156, 104
    %v172 = vpop.permute.xlu0 %171
    %173 = vrot.lane.b32.xlu0 %v159, 104
    %v174 = vpop.permute.xlu0 %173
    %175 = vrot.lane.b32.xlu0 %v156, 96
    %v176 = vpop.permute.xlu0 %175
    %vm177 = vcmask 64512
    %v178 = vsel %vm177, %v156, 0
    %v180 = vsel %vm177, %v176, 0
    %182 = vmatpush.xpose.msra.mxu0 0.0
    %183 = vmatpush.xpose.msra.mxu0 0.0
    %184 = vmatpush.xpose.msra.mxu0 0.0
    %185 = vmatpush.xpose.msra.mxu0 0.0
    %186 = vmatpush.xpose.msra.mxu0 0.0
    %187 = vmatpush.xpose.msra.mxu0 0.0
    %188 = vmatpush.xpose.msra.mxu0 0.0
    %189 = vmatpush.xpose.msra.mxu0 0.0
    %190 = vmatpush.xpose.msra.mxu0 0.0
    %191 = vmatpush.xpose.msra.mxu0 0.0
    %192 = vmatpush.xpose.msra.mxu0 0.0
    %193 = vmatpush.xpose.msra.mxu0 0.0
    %194 = vmatpush.xpose.msra.mxu0 0.0
    %195 = vmatpush.xpose.msra.mxu0 0.0
    %196 = vmatpush.xpose.msra.mxu0 0.0
    %197 = vmatpush.xpose.msra.mxu0 %v180
    %198 = vmatmul.f32.gmra.mxu0 %v178
    %v199 = vpop.f32.mrf.mxu0
    %v200 = vadd.f32 0.0, %v199
    %201 = vdwg.mxu0
    %202 = vrot.lane.b32.xlu0 %v164, 96
    %v203 = vpop.permute.xlu0 %202
    %v204 = vsel %vm177, %v164, 0
    %v206 = vsel %vm177, %v203, 0
    %208 = vmatpush.xpose.msra.mxu0 0.0
    %209 = vmatpush.xpose.msra.mxu0 0.0
    %210 = vmatpush.xpose.msra.mxu0 0.0
    %211 = vmatpush.xpose.msra.mxu0 0.0
    %212 = vmatpush.xpose.msra.mxu0 0.0
    %213 = vmatpush.xpose.msra.mxu0 0.0
    %214 = vmatpush.xpose.msra.mxu0 0.0
    %215 = vmatpush.xpose.msra.mxu0 0.0
    %216 = vmatpush.xpose.msra.mxu0 0.0
    %217 = vmatpush.xpose.msra.mxu0 0.0
    %218 = vmatpush.xpose.msra.mxu0 0.0
    %219 = vmatpush.xpose.msra.mxu0 0.0
    %220 = vmatpush.xpose.msra.mxu0 0.0
    %221 = vmatpush.xpose.msra.mxu0 0.0
    %222 = vmatpush.xpose.msra.mxu0 0.0
    %223 = vmatpush.xpose.msra.mxu0 %v206
    %224 = vmatmul.f32.gmra.mxu0 %v204
    %v225 = vpop.f32.mrf.mxu0
    %v226 = vadd.f32 0.0, %v225
    %227 = vdwg.mxu0
    %228 = vrot.lane.b32.xlu0 %v168, 96
    %v229 = vpop.permute.xlu0 %228
    %v230 = vsel %vm177, %v168, 0
    %v232 = vsel %vm177, %v229, 0
    %234 = vmatpush.xpose.msra.mxu0 0.0
    %235 = vmatpush.xpose.msra.mxu0 0.0
    %236 = vmatpush.xpose.msra.mxu0 0.0
    %237 = vmatpush.xpose.msra.mxu0 0.0
    %238 = vmatpush.xpose.msra.mxu0 0.0
    %239 = vmatpush.xpose.msra.mxu0 0.0
    %240 = vmatpush.xpose.msra.mxu0 0.0
    %241 = vmatpush.xpose.msra.mxu0 0.0
    %242 = vmatpush.xpose.msra.mxu0 0.0
    %243 = vmatpush.xpose.msra.mxu0 0.0
    %244 = vmatpush.xpose.msra.mxu0 0.0
    %245 = vmatpush.xpose.msra.mxu0 0.0
    %246 = vmatpush.xpose.msra.mxu0 0.0
    %247 = vmatpush.xpose.msra.mxu0 0.0
    %248 = vmatpush.xpose.msra.mxu0 0.0
    %249 = vmatpush.xpose.msra.mxu0 %v232
    %250 = vmatmul.f32.gmra.mxu0 %v230
    %v251 = vpop.f32.mrf.mxu0
    %v252 = vadd.f32 0.0, %v251
    %253 = vdwg.mxu0
    %254 = vrot.lane.b32.xlu0 %v172, 96
    %v255 = vpop.permute.xlu0 %254
    %v256 = vsel %vm177, %v172, 0
    %v258 = vsel %vm177, %v255, 0
    %260 = vmatpush.xpose.msra.mxu0 0.0
    %261 = vmatpush.xpose.msra.mxu0 0.0
    %262 = vmatpush.xpose.msra.mxu0 0.0
    %263 = vmatpush.xpose.msra.mxu0 0.0
    %264 = vmatpush.xpose.msra.mxu0 0.0
    %265 = vmatpush.xpose.msra.mxu0 0.0
    %266 = vmatpush.xpose.msra.mxu0 0.0
    %267 = vmatpush.xpose.msra.mxu0 0.0
    %268 = vmatpush.xpose.msra.mxu0 0.0
    %269 = vmatpush.xpose.msra.mxu0 0.0
    %270 = vmatpush.xpose.msra.mxu0 0.0
    %271 = vmatpush.xpose.msra.mxu0 0.0
    %272 = vmatpush.xpose.msra.mxu0 0.0
    %273 = vmatpush.xpose.msra.mxu0 0.0
    %274 = vmatpush.xpose.msra.mxu0 0.0
    %275 = vmatpush.xpose.msra.mxu0 %v258
    %276 = vmatmul.f32.gmra.mxu0 %v256
    %v277 = vpop.f32.mrf.mxu0
    %v278 = vadd.f32 0.0, %v277
    %279 = vdwg.mxu0
    %280 = vrot.lane.b32.xlu0 %v159, 96
    %v281 = vpop.permute.xlu0 %280
    %v282 = vsel %vm177, %v159, 0
    %v284 = vsel %vm177, %v281, 0
    %286 = vmatpush.xpose.msra.mxu0 0.0
    %287 = vmatpush.xpose.msra.mxu0 0.0
    %288 = vmatpush.xpose.msra.mxu0 0.0
    %289 = vmatpush.xpose.msra.mxu0 0.0
    %290 = vmatpush.xpose.msra.mxu0 0.0
    %291 = vmatpush.xpose.msra.mxu0 0.0
    %292 = vmatpush.xpose.msra.mxu0 0.0
    %293 = vmatpush.xpose.msra.mxu0 0.0
    %294 = vmatpush.xpose.msra.mxu0 0.0
    %295 = vmatpush.xpose.msra.mxu0 0.0
    %296 = vmatpush.xpose.msra.mxu0 0.0
    %297 = vmatpush.xpose.msra.mxu0 0.0
    %298 = vmatpush.xpose.msra.mxu0 0.0
    %299 = vmatpush.xpose.msra.mxu0 0.0
    %300 = vmatpush.xpose.msra.mxu0 0.0
    %301 = vmatpush.xpose.msra.mxu0 %v284
    %302 = vmatmul.f32.gmra.mxu0 %v282
    %v303 = vpop.f32.mrf.mxu0
    %v304 = vadd.f32 0.0, %v303
    %305 = vdwg.mxu0
    %306 = vrot.lane.b32.xlu0 %v166, 96
    %v307 = vpop.permute.xlu0 %306
    %v308 = vsel %vm177, %v166, 0
    %v310 = vsel %vm177, %v307, 0
    %312 = vmatpush.xpose.msra.mxu0 0.0
    %313 = vmatpush.xpose.msra.mxu0 0.0
    %314 = vmatpush.xpose.msra.mxu0 0.0
    %315 = vmatpush.xpose.msra.mxu0 0.0
    %316 = vmatpush.xpose.msra.mxu0 0.0
    %317 = vmatpush.xpose.msra.mxu0 0.0
    %318 = vmatpush.xpose.msra.mxu0 0.0
    %319 = vmatpush.xpose.msra.mxu0 0.0
    %320 = vmatpush.xpose.msra.mxu0 0.0
    %321 = vmatpush.xpose.msra.mxu0 0.0
    %322 = vmatpush.xpose.msra.mxu0 0.0
    %323 = vmatpush.xpose.msra.mxu0 0.0
    %324 = vmatpush.xpose.msra.mxu0 0.0
    %325 = vmatpush.xpose.msra.mxu0 0.0
    %326 = vmatpush.xpose.msra.mxu0 0.0
    %327 = vmatpush.xpose.msra.mxu0 %v310
    %328 = vmatmul.f32.gmra.mxu0 %v308
    %v329 = vpop.f32.mrf.mxu0
    %v330 = vadd.f32 0.0, %v329
    %331 = vdwg.mxu0
    %332 = vrot.lane.b32.xlu0 %v170, 96
    %v333 = vpop.permute.xlu0 %332
    %v334 = vsel %vm177, %v170, 0
    %v336 = vsel %vm177, %v333, 0
    %338 = vmatpush.xpose.msra.mxu0 0.0
    %339 = vmatpush.xpose.msra.mxu0 0.0
    %340 = vmatpush.xpose.msra.mxu0 0.0
    %341 = vmatpush.xpose.msra.mxu0 0.0
    %342 = vmatpush.xpose.msra.mxu0 0.0
    %343 = vmatpush.xpose.msra.mxu0 0.0
    %344 = vmatpush.xpose.msra.mxu0 0.0
    %345 = vmatpush.xpose.msra.mxu0 0.0
    %346 = vmatpush.xpose.msra.mxu0 0.0
    %347 = vmatpush.xpose.msra.mxu0 0.0
    %348 = vmatpush.xpose.msra.mxu0 0.0
    %349 = vmatpush.xpose.msra.mxu0 0.0
    %350 = vmatpush.xpose.msra.mxu0 0.0
    %351 = vmatpush.xpose.msra.mxu0 0.0
    %352 = vmatpush.xpose.msra.mxu0 0.0
    %353 = vmatpush.xpose.msra.mxu0 %v336
    %354 = vmatmul.f32.gmra.mxu0 %v334
    %v355 = vpop.f32.mrf.mxu0
    %v356 = vadd.f32 0.0, %v355
    %357 = vdwg.mxu0
    %358 = vrot.lane.b32.xlu0 %v174, 96
    %v359 = vpop.permute.xlu0 %358
    %v360 = vsel %vm177, %v174, 0
    %v362 = vsel %vm177, %v359, 0
    %364 = vmatpush.xpose.msra.mxu0 0.0
    %365 = vmatpush.xpose.msra.mxu0 0.0
    %366 = vmatpush.xpose.msra.mxu0 0.0
    %367 = vmatpush.xpose.msra.mxu0 0.0
    %368 = vmatpush.xpose.msra.mxu0 0.0
    %369 = vmatpush.xpose.msra.mxu0 0.0
    %370 = vmatpush.xpose.msra.mxu0 0.0
    %371 = vmatpush.xpose.msra.mxu0 0.0
    %372 = vmatpush.xpose.msra.mxu0 0.0
    %373 = vmatpush.xpose.msra.mxu0 0.0
    %374 = vmatpush.xpose.msra.mxu0 0.0
    %375 = vmatpush.xpose.msra.mxu0 0.0
    %376 = vmatpush.xpose.msra.mxu0 0.0
    %377 = vmatpush.xpose.msra.mxu0 0.0
    %378 = vmatpush.xpose.msra.mxu0 0.0
    %379 = vmatpush.xpose.msra.mxu0 %v362
    %380 = vmatmul.f32.gmra.mxu0 %v360
    %v381 = vpop.f32.mrf.mxu0
    %v382 = vadd.f32 0.0, %v381
    %383 = vdwg.mxu0
    %v384 = vsel %vm177, %v200, -inf
    %385 = vmax.xlane.f32.xlu0 %v384
    %v386 = vpop.xlane.xlu0 %385
    %v387 = vsel %vm177, %v226, -inf
    %388 = vmax.xlane.f32.xlu0 %v387
    %v389 = vpop.xlane.xlu0 %388
    %v390 = vsel %vm177, %v252, -inf
    %391 = vmax.xlane.f32.xlu0 %v390
    %v392 = vpop.xlane.xlu0 %391
    %v393 = vsel %vm177, %v278, -inf
    %394 = vmax.xlane.f32.xlu0 %v393
    %v395 = vpop.xlane.xlu0 %394
    %v396 = vsel %vm177, %v304, -inf
    %397 = vmax.xlane.f32.xlu0 %v396
    %v398 = vpop.xlane.xlu0 %397
    %v399 = vsel %vm177, %v330, -inf
    %400 = vmax.xlane.f32.xlu0 %v399
    %v401 = vpop.xlane.xlu0 %400
    %v402 = vsel %vm177, %v356, -inf
    %403 = vmax.xlane.f32.xlu0 %v402
    %v404 = vpop.xlane.xlu0 %403
    %v405 = vsel %vm177, %v382, -inf
    %406 = vmax.xlane.f32.xlu0 %v405
    %v407 = vpop.xlane.xlu0 %406
    %v408 = vsub.f32 %v200, %v386
    %v409 = vsub.f32 %v226, %v389
    %v410 = vsub.f32 %v252, %v392
    %v411 = vsub.f32 %v278, %v395
    %v412 = vsub.f32 %v304, %v398
    %v413 = vsub.f32 %v330, %v401
    %v414 = vsub.f32 %v356, %v404
    %v415 = vsub.f32 %v382, %v407
    %v416 = vmul.f32 %v408, 1.442695
    %v417 = vpow.pop %v416
    %v418 = vmul.f32 %v409, 1.442695
    %v419 = vpow.pop %v418
    %v420 = vmul.f32 %v410, 1.442695
    %v421 = vpow.pop %v420
    %v422 = vmul.f32 %v411, 1.442695
    %v423 = vpow.pop %v422
    %v424 = vmul.f32 %v412, 1.442695
    %v425 = vpow.pop %v424
    %v426 = vmul.f32 %v413, 1.442695
    %v427 = vpow.pop %v426
    %v428 = vmul.f32 %v414, 1.442695
    %v429 = vpow.pop %v428
    %v430 = vmul.f32 %v415, 1.442695
    %v431 = vpow.pop %v430
    %v432 = vsel %vm177, %v417, 0.0
    %433 = vadd.xlane.f32.xlu0 %v432
    %v434 = vpop.xlane.xlu0 %433
    %v435 = vsel %vm177, %v419, 0.0
    %436 = vadd.xlane.f32.xlu0 %v435
    %v437 = vpop.xlane.xlu0 %436
    %v438 = vsel %vm177, %v421, 0.0
    %439 = vadd.xlane.f32.xlu0 %v438
    %v440 = vpop.xlane.xlu0 %439
    %v441 = vsel %vm177, %v423, 0.0
    %442 = vadd.xlane.f32.xlu0 %v441
    %v443 = vpop.xlane.xlu0 %442
    %v444 = vsel %vm177, %v425, 0.0
    %445 = vadd.xlane.f32.xlu0 %v444
    %v446 = vpop.xlane.xlu0 %445
    %v447 = vsel %vm177, %v427, 0.0
    %448 = vadd.xlane.f32.xlu0 %v447
    %v449 = vpop.xlane.xlu0 %448
    %v450 = vsel %vm177, %v429, 0.0
    %451 = vadd.xlane.f32.xlu0 %v450
    %v452 = vpop.xlane.xlu0 %451
    %v453 = vsel %vm177, %v431, 0.0
    %454 = vadd.xlane.f32.xlu0 %v453
    %v455 = vpop.xlane.xlu0 %454
    %v456 = vrcp.pop %v434
    %v457 = vrcp.pop %v437
    %v458 = vrcp.pop %v440
    %v459 = vrcp.pop %v443
    %v460 = vrcp.pop %v446
    %v461 = vrcp.pop %v449
    %v462 = vrcp.pop %v452
    %v463 = vrcp.pop %v455
    %v464 = vmul.f32 %v417, %v456
    %v465 = vmul.f32 %v419, %v457
    %v466 = vmul.f32 %v421, %v458
    %v467 = vmul.f32 %v423, %v459
    %v468 = vmul.f32 %v425, %v460
    %v469 = vmul.f32 %v427, %v461
    %v470 = vmul.f32 %v429, %v462
    %v471 = vmul.f32 %v431, %v463
    %472 = vrot.lane.b32.xlu0 %v156, 64
    %v473 = vpop.permute.xlu0 %472
    %v476 = vsel %vm177, %v464, 0
    %478 = vmatpush.msra.mxu0 0.0
    %479 = vmatpush.msra.mxu0 0.0
    %480 = vmatpush.msra.mxu0 0.0
    %481 = vmatpush.msra.mxu0 0.0
    %482 = vmatpush.msra.mxu0 0.0
    %483 = vmatpush.msra.mxu0 0.0
    %484 = vmatpush.msra.mxu0 0.0
    %485 = vmatpush.msra.mxu0 0.0
    %486 = vmatpush.msra.mxu0 0.0
    %487 = vmatpush.msra.mxu0 0.0
    %488 = vmatpush.msra.mxu0 0.0
    %489 = vmatpush.msra.mxu0 0.0
    %490 = vmatpush.msra.mxu0 0.0
    %491 = vmatpush.msra.mxu0 0.0
    %492 = vmatpush.msra.mxu0 0.0
    %493 = vmatpush.msra.mxu0 %v473
    %494 = vmatmul.f32.gmra.mxu0 %v476
    %v495 = vpop.f32.mrf.mxu0
    %v496 = vadd.f32 0.0, %v495
    %497 = vdwg.mxu0
    %498 = vrot.lane.b32.xlu0 %v164, 64
    %v499 = vpop.permute.xlu0 %498
    %v502 = vsel %vm177, %v465, 0
    %504 = vmatpush.msra.mxu0 0.0
    %505 = vmatpush.msra.mxu0 0.0
    %506 = vmatpush.msra.mxu0 0.0
    %507 = vmatpush.msra.mxu0 0.0
    %508 = vmatpush.msra.mxu0 0.0
    %509 = vmatpush.msra.mxu0 0.0
    %510 = vmatpush.msra.mxu0 0.0
    %511 = vmatpush.msra.mxu0 0.0
    %512 = vmatpush.msra.mxu0 0.0
    %513 = vmatpush.msra.mxu0 0.0
    %514 = vmatpush.msra.mxu0 0.0
    %515 = vmatpush.msra.mxu0 0.0
    %516 = vmatpush.msra.mxu0 0.0
    %517 = vmatpush.msra.mxu0 0.0
    %518 = vmatpush.msra.mxu0 0.0
    %519 = vmatpush.msra.mxu0 %v499
    %520 = vmatmul.f32.gmra.mxu0 %v502
    %v521 = vpop.f32.mrf.mxu0
    %v522 = vadd.f32 0.0, %v521
    %523 = vdwg.mxu0
    %524 = vrot.lane.b32.xlu0 %v168, 64
    %v525 = vpop.permute.xlu0 %524
    %v528 = vsel %vm177, %v466, 0
    %530 = vmatpush.msra.mxu0 0.0
    %531 = vmatpush.msra.mxu0 0.0
    %532 = vmatpush.msra.mxu0 0.0
    %533 = vmatpush.msra.mxu0 0.0
    %534 = vmatpush.msra.mxu0 0.0
    %535 = vmatpush.msra.mxu0 0.0
    %536 = vmatpush.msra.mxu0 0.0
    %537 = vmatpush.msra.mxu0 0.0
    %538 = vmatpush.msra.mxu0 0.0
    %539 = vmatpush.msra.mxu0 0.0
    %540 = vmatpush.msra.mxu0 0.0
    %541 = vmatpush.msra.mxu0 0.0
    %542 = vmatpush.msra.mxu0 0.0
    %543 = vmatpush.msra.mxu0 0.0
    %544 = vmatpush.msra.mxu0 0.0
    %545 = vmatpush.msra.mxu0 %v525
    %546 = vmatmul.f32.gmra.mxu0 %v528
    %v547 = vpop.f32.mrf.mxu0
    %v548 = vadd.f32 0.0, %v547
    %549 = vdwg.mxu0
    %550 = vrot.lane.b32.xlu0 %v172, 64
    %v551 = vpop.permute.xlu0 %550
    %v554 = vsel %vm177, %v467, 0
    %556 = vmatpush.msra.mxu0 0.0
    %557 = vmatpush.msra.mxu0 0.0
    %558 = vmatpush.msra.mxu0 0.0
    %559 = vmatpush.msra.mxu0 0.0
    %560 = vmatpush.msra.mxu0 0.0
    %561 = vmatpush.msra.mxu0 0.0
    %562 = vmatpush.msra.mxu0 0.0
    %563 = vmatpush.msra.mxu0 0.0
    %564 = vmatpush.msra.mxu0 0.0
    %565 = vmatpush.msra.mxu0 0.0
    %566 = vmatpush.msra.mxu0 0.0
    %567 = vmatpush.msra.mxu0 0.0
    %568 = vmatpush.msra.mxu0 0.0
    %569 = vmatpush.msra.mxu0 0.0
    %570 = vmatpush.msra.mxu0 0.0
    %571 = vmatpush.msra.mxu0 %v551
    %572 = vmatmul.f32.gmra.mxu0 %v554
    %v573 = vpop.f32.mrf.mxu0
    %v574 = vadd.f32 0.0, %v573
    %575 = vdwg.mxu0
    %576 = vrot.lane.b32.xlu0 %v159, 64
    %v577 = vpop.permute.xlu0 %576
    %v580 = vsel %vm177, %v468, 0
    %582 = vmatpush.msra.mxu0 0.0
    %583 = vmatpush.msra.mxu0 0.0
    %584 = vmatpush.msra.mxu0 0.0
    %585 = vmatpush.msra.mxu0 0.0
    %586 = vmatpush.msra.mxu0 0.0
    %587 = vmatpush.msra.mxu0 0.0
    %588 = vmatpush.msra.mxu0 0.0
    %589 = vmatpush.msra.mxu0 0.0
    %590 = vmatpush.msra.mxu0 0.0
    %591 = vmatpush.msra.mxu0 0.0
    %592 = vmatpush.msra.mxu0 0.0
    %593 = vmatpush.msra.mxu0 0.0
    %594 = vmatpush.msra.mxu0 0.0
    %595 = vmatpush.msra.mxu0 0.0
    %596 = vmatpush.msra.mxu0 0.0
    %597 = vmatpush.msra.mxu0 %v577
    %598 = vmatmul.f32.gmra.mxu0 %v580
    %v599 = vpop.f32.mrf.mxu0
    %v600 = vadd.f32 0.0, %v599
    %601 = vdwg.mxu0
    %602 = vrot.lane.b32.xlu0 %v166, 64
    %v603 = vpop.permute.xlu0 %602
    %v606 = vsel %vm177, %v469, 0
    %608 = vmatpush.msra.mxu0 0.0
    %609 = vmatpush.msra.mxu0 0.0
    %610 = vmatpush.msra.mxu0 0.0
    %611 = vmatpush.msra.mxu0 0.0
    %612 = vmatpush.msra.mxu0 0.0
    %613 = vmatpush.msra.mxu0 0.0
    %614 = vmatpush.msra.mxu0 0.0
    %615 = vmatpush.msra.mxu0 0.0
    %616 = vmatpush.msra.mxu0 0.0
    %617 = vmatpush.msra.mxu0 0.0
    %618 = vmatpush.msra.mxu0 0.0
    %619 = vmatpush.msra.mxu0 0.0
    %620 = vmatpush.msra.mxu0 0.0
    %621 = vmatpush.msra.mxu0 0.0
    %622 = vmatpush.msra.mxu0 0.0
    %623 = vmatpush.msra.mxu0 %v603
    %624 = vmatmul.f32.gmra.mxu0 %v606
    %v625 = vpop.f32.mrf.mxu0
    %v626 = vadd.f32 0.0, %v625
    %627 = vdwg.mxu0
    %628 = vrot.lane.b32.xlu0 %v170, 64
    %v629 = vpop.permute.xlu0 %628
    %v632 = vsel %vm177, %v470, 0
    %634 = vmatpush.msra.mxu0 0.0
    %635 = vmatpush.msra.mxu0 0.0
    %636 = vmatpush.msra.mxu0 0.0
    %637 = vmatpush.msra.mxu0 0.0
    %638 = vmatpush.msra.mxu0 0.0
    %639 = vmatpush.msra.mxu0 0.0
    %640 = vmatpush.msra.mxu0 0.0
    %641 = vmatpush.msra.mxu0 0.0
    %642 = vmatpush.msra.mxu0 0.0
    %643 = vmatpush.msra.mxu0 0.0
    %644 = vmatpush.msra.mxu0 0.0
    %645 = vmatpush.msra.mxu0 0.0
    %646 = vmatpush.msra.mxu0 0.0
    %647 = vmatpush.msra.mxu0 0.0
    %648 = vmatpush.msra.mxu0 0.0
    %649 = vmatpush.msra.mxu0 %v629
    %650 = vmatmul.f32.gmra.mxu0 %v632
    %v651 = vpop.f32.mrf.mxu0
    %v652 = vadd.f32 0.0, %v651
    %653 = vdwg.mxu0
    %654 = vrot.lane.b32.xlu0 %v174, 64
    %v655 = vpop.permute.xlu0 %654
    %v658 = vsel %vm177, %v471, 0
    %660 = vmatpush.msra.mxu0 0.0
    %661 = vmatpush.msra.mxu0 0.0
    %662 = vmatpush.msra.mxu0 0.0
    %663 = vmatpush.msra.mxu0 0.0
    %664 = vmatpush.msra.mxu0 0.0
    %665 = vmatpush.msra.mxu0 0.0
    %666 = vmatpush.msra.mxu0 0.0
    %667 = vmatpush.msra.mxu0 0.0
    %668 = vmatpush.msra.mxu0 0.0
    %669 = vmatpush.msra.mxu0 0.0
    %670 = vmatpush.msra.mxu0 0.0
    %671 = vmatpush.msra.mxu0 0.0
    %672 = vmatpush.msra.mxu0 0.0
    %673 = vmatpush.msra.mxu0 0.0
    %674 = vmatpush.msra.mxu0 0.0
    %675 = vmatpush.msra.mxu0 %v655
    %676 = vmatmul.f32.gmra.mxu0 %v658
    %v677 = vpop.f32.mrf.mxu0
    %v678 = vadd.f32 0.0, %v677
    %679 = vdwg.mxu0
    %682 = vrot.lane.b32.xlu0 %v522, 8
    %v683 = vpop.permute.xlu0 %682
    %684 = vrot.lane.b32.xlu0 %v626, 8
    %v685 = vpop.permute.xlu0 %684
    %690 = vrot.lane.b32.xlu0 %v548, 16
    %v691 = vpop.permute.xlu0 %690
    %692 = vrot.lane.b32.xlu0 %v652, 16
    %v693 = vpop.permute.xlu0 %692
    %698 = vrot.lane.b32.xlu0 %v574, 24
    %v699 = vpop.permute.xlu0 %698
    %700 = vrot.lane.b32.xlu0 %v678, 24
    %v701 = vpop.permute.xlu0 %700
    %v704 = vsel %vm177, %v496, %v683
    %v705 = vsel %vm177, %v600, %v685
    %vm706 = vcmask 130048
    %v707 = vsel %vm706, %v704, %v691
    %v708 = vsel %vm706, %v705, %v693
    %vm709 = vcmask 195584
    %v710 = vsel %vm709, %v707, %v699
    %v711 = vsel %vm709, %v708, %v701
    %v712 = vld [vmem:[#allocation7] sm:$0xff]
    %v713 = vld [vmem:[#allocation7 + $0x8] sm:$0xff]
    %v714 = vld [vmem:[#allocation7 + $0x10] sm:$0xff]
    %v715 = vld [vmem:[#allocation7 + $0x18] sm:$0xff]
    %v716 = vld [vmem:[%s4] sm:$0x1]
    %v718 = vperm.slane %v716, 0
    %v721 = vsel %vm131, %v710, 0
    %v724 = vsel %vm131, %v711, 0
    %726 = vmatpush.msra.mxu0 0.0
    %727 = vmatpush.msra.mxu0 0.0
    %728 = vmatpush.msra.mxu0 0.0
    %729 = vmatpush.msra.mxu0 0.0
    %730 = vmatpush.msra.mxu0 0.0
    %731 = vmatpush.msra.mxu0 0.0
    %732 = vmatpush.msra.mxu0 0.0
    %733 = vmatpush.msra.mxu0 0.0
    %734 = vmatpush.msra.mxu0 0.0
    %735 = vmatpush.msra.mxu0 0.0
    %736 = vmatpush.msra.mxu0 0.0
    %737 = vmatpush.msra.mxu0 0.0
    %738 = vmatpush.msra.mxu0 %v715
    %739 = vmatpush.msra.mxu0 %v714
    %740 = vmatpush.msra.mxu0 %v713
    %741 = vmatpush.msra.mxu0 %v712
    %742 = vmatmul.f32.gmra.mxu0 %v721
    %v743 = vpop.f32.mrf.mxu0
    %v744 = vadd.f32 %v718, %v743
    %745 = vmatmul.f32.gmra.mxu0 %v724
    %v746 = vpop.f32.mrf.mxu0
    %v747 = vadd.f32 %v718, %v746
    %748 = vdwg.mxu0
    %v749 = vadd.f32 %v744, %v120
    %v750 = vadd.f32 %v747, %v122
    %v751 = vsel %vm131, %v749, 0.0
    %752 = vadd.xlane.f32.xlu0 %v751
    %v753 = vpop.xlane.xlu0 %752
    %v754 = vsel %vm131, %v750, 0.0
    %755 = vadd.xlane.f32.xlu0 %v754
    %v756 = vpop.xlane.xlu0 %755
    %v757 = vrcp.pop 32.0
    %v758 = vmul.f32 32.0, %v757
    %v759 = vsub.f32 1.0, %v758
    %v760 = vmul.f32 %v757, %v759
    %v761 = vadd.f32 %v757, %v760
    %vm762 = vweird.f32 %v757
    %v763 = vsel %vm762, %v757, %v761
    %v764 = vmul.f32 %v753, %v763
    %v765 = vmul.f32 %v756, %v763
    %v766 = vsub.f32 %v749, %v764
    %v767 = vsub.f32 %v750, %v765
    %v768 = vmul.f32 %v766, %v766
    %v769 = vmul.f32 %v767, %v767
    %v770 = vsel %vm131, %v768, 0.0
    %771 = vadd.xlane.f32.xlu0 %v770
    %v772 = vpop.xlane.xlu0 %771
    %v773 = vsel %vm131, %v769, 0.0
    %774 = vadd.xlane.f32.xlu0 %v773
    %v775 = vpop.xlane.xlu0 %774
    %v776 = vmul.f32 %v772, %v763
    %v777 = vmul.f32 %v775, %v763
    %v778 = vadd.f32 %v776, 1e-05
    %v779 = vadd.f32 %v777, 1e-05
    %v780 = vrsqrt.pop %v778
    %v781 = vmul.f32 %v780, %v778
    %v782 = vmul.f32 %v781, %v780
    %v783 = vmul.f32 0.5, %v782
    %v784 = vsub.f32 1.5, %v783
    %v785 = vmul.f32 %v780, %v784
    %vm786 = vweird.f32 %v778
    %vm787 = vweird.f32 %v780
    %vm788 = vmor %vm786, %vm787
    %v789 = vsel %vm788, %v780, %v785
    %v790 = vrsqrt.pop %v779
    %v791 = vmul.f32 %v790, %v779
    %v792 = vmul.f32 %v791, %v790
    %v793 = vmul.f32 0.5, %v792
    %v794 = vsub.f32 1.5, %v793
    %v795 = vmul.f32 %v790, %v794
    %vm796 = vweird.f32 %v779
    %vm797 = vweird.f32 %v790
    %vm798 = vmor %vm796, %vm797
    %v799 = vsel %vm798, %v790, %v795
    %v800 = vmul.f32 %v766, %v789
    %v801 = vmul.f32 %v767, %v799
    %v802 = vld [vmem:[%s5] sm:$0x1]
    %v804 = vperm.slane %v802, 0
    %v806 = vmul.f32 %v800, %v804
    %v807 = vmul.f32 %v801, %v804
    %v808 = vld [vmem:[%s6] sm:$0x1]
    %v810 = vperm.slane %v808, 0
    %v812 = vadd.f32 %v806, %v810
    %v813 = vadd.f32 %v807, %v810
    %v814 = vrot.slane %v812, 4
    %v815 = vsel %vm83, 0.0, %v814
    %v817 = vunpack.c.l.s4 1983009808
    %v818 = vunpack.c.0.s8 %v817
    %v819 = vperm.slane %v812, %v818
    %v821 = vunpack.c.l.s4 1983009808
    %v822 = vunpack.c.0.s8 %v821
    %v823 = vperm.slane %v815, %v822
    %v824 = vrot.slane %v813, 4
    %v825 = vsel %vm83, 0.0, %v824
    %v827 = vunpack.c.l.s4 1983009808
    %v828 = vunpack.c.0.s8 %v827
    %v829 = vperm.slane %v813, %v828
    %v831 = vunpack.c.l.s4 1983009808
    %v832 = vunpack.c.0.s8 %v831
    %v833 = vperm.slane %v825, %v832
    %v834 = vrot.slane %v829, 4
    %v835 = vsel %vm83, %v834, %v819
    %v836 = vrot.slane %v819, 4
    %v837 = vsel %vm83, %v829, %v836
    %v839 = vunpack.c.l.s4 1934713408
    %v840 = vunpack.c.0.s8 %v839
    %v841 = vperm.slane %v835, %v840
    %v843 = vunpack.c.l.s4 1934713408
    %v844 = vunpack.c.0.s8 %v843
    %v845 = vperm.slane %v837, %v844
    %v846 = vrot.slane %v833, 4
    %v847 = vsel %vm83, %v846, %v823
    %v848 = vrot.slane %v823, 4
    %v849 = vsel %vm83, %v833, %v848
    %v851 = vunpack.c.l.s4 1934713408
    %v852 = vunpack.c.0.s8 %v851
    %v853 = vperm.slane %v847, %v852
    %v855 = vunpack.c.l.s4 1934713408
    %v856 = vunpack.c.0.s8 %v855
    %v857 = vperm.slane %v849, %v856
    %v858 = vrot.slane %v841, 4
    %v859 = vsel %vm83, 0.0, %v858
    %v860 = vrot.slane %v845, 4
    %v861 = vsel %vm83, 0.0, %v860
    %v862 = vrot.slane %v853, 4
    %v863 = vsel %vm83, 0.0, %v862
    %v864 = vrot.slane %v857, 4
    %v865 = vsel %vm83, 0.0, %v864
    %vm866 = vcmask 254976
    %867 = vst.msk [vmem:[#allocation8] sm:$0x3] %vm866, %v841
    %868 = vst.msk [vmem:[#allocation8 + $0x2] sm:$0x3] %vm866, %v859
    %869 = vst.msk [vmem:[#allocation8 + $0x4] sm:$0x3] %vm866, %v845
    %870 = vst.msk [vmem:[#allocation8 + $0x6] sm:$0x3] %vm866, %v861
    %871 = vst.msk [vmem:[#allocation8 + $0x8] sm:$0x3] %vm866, %v853
    %872 = vst.msk [vmem:[#allocation8 + $0xa] sm:$0x3] %vm866, %v863
    %873 = vst.msk [vmem:[#allocation8 + $0xc] sm:$0x3] %vm866, %v857
    %874 = vst.msk [vmem:[#allocation8 + $0xe] sm:$0x3] %vm866, %v865
    // Predicated region
    $region42: #{tpu_custom_call.1} parent=1 // pred_check
      _
    $region43: #{tpu_custom_call.1} parent=1 // pred_check_branch
      %876 = sbr.rel (0) target = $region45
    $region44: #{tpu_custom_call.1} parent=1 // pred_region
      %878 = vsyncadd [#allocation4], 0
      %s879 = sshll.u32 [#allocation8], 4
      %s880 = int_to_ptr.vmem [resolvable:$true] %s879
      %s881 = sshll.u32 %s7, 4
      %s882 = int_to_ptr.hbm [resolvable:$true] %s881
      %887 = dma.vmem_to_hbm [thread:$0]  %s880, 256, %s882, [#allocation4], 32, 32, 2
    $region45: #{tpu_custom_call.1} parent=1 // pred_fallthru
      _
    // Predicated region
    $region46: #{tpu_custom_call.1} parent=1 // pred_check
      _
    $region47: #{tpu_custom_call.1} parent=1 // pred_check_branch
      %889 = sbr.rel (0) target = $region49
    $region48: #{tpu_custom_call.1} parent=1 // pred_region
      %891 = dma.done [#allocation4], 256
    $region49: #{tpu_custom_call.1} parent=1 // pred_fallthru
      _
    %892 = vsyncpa [#allocation3], 1
    %893 = vsyncpa [#allocation6], 1
    %894 = vsyncpa [#allocation4], 1

</llo_original>
